<compile_context>
chip_gen: v7x
topology: tpu7x:2x2x1
jax: 0.10.0
libtpu: 0.0.40
codegen_flags: <defaults>
</compile_context>

<pallas_src>
from functools import partial

import jax
import jax.numpy as jnp
import numpy as np
from jax import lax
from jax.experimental import pallas as pl
from jax.experimental.pallas import tpu as pltpu


# ---------------------------------------------------------------------------
# Tiled linear (matmul + bias) kernel
# ---------------------------------------------------------------------------
def _linear_kernel(x_ref, w_ref, b_ref, o_ref, acc_ref):
    k = pl.program_id(2)

    @pl.when(k == 0)
    def _init():
        acc_ref[...] = jnp.zeros(acc_ref.shape, dtype=acc_ref.dtype)

    acc_ref[...] += jnp.dot(
        x_ref[...], w_ref[...], preferred_element_type=jnp.float32
    )

    @pl.when(k == pl.num_programs(2) - 1)
    def _finalize():
        # bias added only once, at the end of the k-reduction
        o_ref[...] = (acc_ref[...] + b_ref[...].astype(jnp.float32)).astype(o_ref.dtype)


def _pick_tile(dim, preferred):
    """Use the preferred tile if it divides the dim, else fall back to full dim."""
    return preferred if dim % preferred == 0 else dim


def pallas_linear(x2d, wt, b2, *, tm=128, tn=128, tk=256):
    """x2d: (M, Cin); wt: (Cin, Cout) (already transposed); b2: (1, Cout)."""
    M, Cin = x2d.shape
    Cout = wt.shape[1]
    tm = _pick_tile(M, tm)
    tn = _pick_tile(Cout, tn)
    tk = _pick_tile(Cin, tk)
    grid = (M // tm, Cout // tn, Cin // tk)

    return pl.pallas_call(
        _linear_kernel,
        out_shape=jax.ShapeDtypeStruct((M, Cout), x2d.dtype),
        grid_spec=pltpu.PrefetchScalarGridSpec(
            num_scalar_prefetch=0,
            grid=grid,
            in_specs=[
                pl.BlockSpec((tm, tk), lambda i, j, k: (i, k)),
                pl.BlockSpec((tk, tn), lambda i, j, k: (k, j)),
                pl.BlockSpec((1, tn), lambda i, j, k: (0, j)),
            ],
            out_specs=pl.BlockSpec((tm, tn), lambda i, j, k: (i, j)),
            scratch_shapes=[pltpu.VMEM((tm, tn), jnp.float32)],
        ),
        compiler_params=pltpu.CompilerParams(
            dimension_semantics=("parallel", "parallel", "arbitrary"),
            vmem_limit_bytes=48 * 1024 * 1024,
        ),
    )(x2d, wt, b2)


# ---------------------------------------------------------------------------
# Flash-attention core kernel
# ---------------------------------------------------------------------------
def _flash_attn_kernel(q_ref, k_ref, v_ref, o_ref, m_ref, l_ref, acc_ref,
                       *, causal, tq, tkv):
    q_idx = pl.program_id(2)
    kv_idx = pl.program_id(3)

    @pl.when(kv_idx == 0)
    def _init():
        m_ref[...] = jnp.full(m_ref.shape, -jnp.inf, dtype=m_ref.dtype)
        l_ref[...] = jnp.zeros(l_ref.shape, dtype=l_ref.dtype)
        acc_ref[...] = jnp.zeros(acc_ref.shape, dtype=acc_ref.dtype)

    def _compute():
        q = q_ref[0]      # (tq, D)  (softmax scale already folded into W_q)
        k = k_ref[0]      # (tkv, D)
        v = v_ref[0]      # (tkv, D)

        # Contract on the last dims of q and k: no in-kernel k.T materialization.
        s = lax.dot_general(
            q, k, (((1,), (1,)), ((), ())),
            preferred_element_type=jnp.float32,
        )                                                   # (tq, tkv), f32

        if causal:
            row = q_idx * tq + lax.broadcasted_iota(jnp.int32, s.shape, 0)
            col = kv_idx * tkv + lax.broadcasted_iota(jnp.int32, s.shape, 1)
            s = jnp.where(col > row, -jnp.finfo(jnp.float32).max, s)

        m_prev = m_ref[...]                                  # (tq, 1)
        m_new = jnp.maximum(m_prev, jnp.max(s, axis=-1, keepdims=True))
        alpha = jnp.exp(m_prev - m_new)
        p = jnp.exp(s - m_new)                               # unnormalized probs
        l_ref[...] = alpha * l_ref[...] + jnp.sum(p, axis=-1, keepdims=True)
        acc_ref[...] = alpha * acc_ref[...] + jnp.dot(
            p.astype(v.dtype), v, preferred_element_type=jnp.float32
        )
        m_ref[...] = m_new

    if causal:
        # Skip kv tiles that lie strictly above the diagonal (fully masked).
        @pl.when(kv_idx * tkv < q_idx * tq + tq)
        def _():
            _compute()
    else:
        _compute()

    @pl.when(kv_idx == pl.num_programs(3) - 1)
    def _finalize():
        o_ref[0] = (acc_ref[...] * pl.reciprocal(l_ref[...])).astype(o_ref.dtype)


def pallas_flash_attention(qkv, num_heads, causal, *, tq=128, tkv=128):
    """qkv: (B, N, 3C) laid out as [q | k | v] along the last dim (q pre-scaled).

    Returns the attention output in (B, N, C) layout (heads already merged).
    """
    B, N, threeC = qkv.shape
    C = threeC // 3
    H = num_heads
    D = C // H
    tq = _pick_tile(N, tq)
    tkv = _pick_tile(N, tkv)
    grid = (B, H, N // tq, N // tkv)

    q_spec = pl.BlockSpec((1, tq, D), lambda b, h, qi, ki: (b, qi, h))
    k_spec = pl.BlockSpec((1, tkv, D), lambda b, h, qi, ki: (b, ki, H + h))
    v_spec = pl.BlockSpec((1, tkv, D), lambda b, h, qi, ki: (b, ki, 2 * H + h))
    o_spec = pl.BlockSpec((1, tq, D), lambda b, h, qi, ki: (b, qi, h))

    kernel = partial(_flash_attn_kernel, causal=causal, tq=tq, tkv=tkv)
    return pl.pallas_call(
        kernel,
        out_shape=jax.ShapeDtypeStruct((B, N, C), qkv.dtype),
        grid_spec=pltpu.PrefetchScalarGridSpec(
            num_scalar_prefetch=0,
            grid=grid,
            in_specs=[q_spec, k_spec, v_spec],
            out_specs=o_spec,
            scratch_shapes=[
                pltpu.VMEM((tq, 1), jnp.float32),   # m  (running max)
                pltpu.VMEM((tq, 1), jnp.float32),   # l  (running denom)
                pltpu.VMEM((tq, D), jnp.float32),   # acc
            ],
        ),
        compiler_params=pltpu.CompilerParams(
            dimension_semantics=("parallel", "parallel", "parallel", "arbitrary"),
            vmem_limit_bytes=48 * 1024 * 1024,
        ),
    )(qkv, qkv, qkv)


# ---------------------------------------------------------------------------
# Parameter preparation + forward
# ---------------------------------------------------------------------------
def prepare_params(params, num_heads):
    """Convert PyTorch-layout weights to kernel layout once (outside the hot path)."""
    C = params["wq"].shape[0]
    D = C // num_heads
    scale = D ** (-0.5)
    # Fold the softmax scale into the q projection: x @ (scale*Wq).T == scale*(x @ Wq.T)
    wq_t = (jnp.asarray(params["wq"]) * scale).T            # (C, C)
    wk_t = jnp.asarray(params["wk"]).T
    wv_t = jnp.asarray(params["wv"]).T
    w_qkv = jnp.concatenate([wq_t, wk_t, wv_t], axis=1)     # (C, 3C)
    b_qkv = jnp.zeros((1, 3 * C), dtype=w_qkv.dtype)        # qkv_bias=False
    wo_t = jnp.asarray(params["wo"]).T                      # (C, C)
    bo = jnp.asarray(params["bo"]).reshape(1, C)
    return {"w_qkv": w_qkv, "b_qkv": b_qkv, "wo_t": wo_t, "bo": bo}


def attention_forward(x, prepared, num_heads, causal=False):
    """Pallas re-implementation of Attention.forward. x: (B, N, C)."""
    B, N, C = x.shape
    x2d = x.reshape(B * N, C)

    # Fused QKV projection -> (B*N, 3C)
    qkv = pallas_linear(x2d, prepared["w_qkv"], prepared["b_qkv"])
    qkv = qkv.reshape(B, N, 3 * C)                          # pure metadata reshape

    # Flash attention core -> (B, N, C) (heads merged in-kernel via BlockSpecs)
    o = pallas_flash_attention(qkv, num_heads, causal)

    # Output projection
    o2d = pallas_linear(o.reshape(B * N, C), prepared["wo_t"], prepared["bo"])
    return o2d.reshape(B, N, C)


# ---------------------------------------------------------------------------
# Pure-JAX reference (mirrors the PyTorch module exactly)
# ---------------------------------------------------------------------------
def attention_reference(x, params, num_heads, causal=False):
    B, N, C = x.shape
    head_dim = C // num_heads
    scale = head_dim ** (-0.5)

    def lin(t, w, b=None):
        y = t @ w.T
        return y if b is None else y + b

    q = lin(x, params["wq"]).reshape(B, N, num_heads, head_dim).transpose(0, 2, 1, 3)
    k = lin(x, params["wk"]).reshape(B, N, num_heads, head_dim).transpose(0, 2, 1, 3)
    v = lin(x, params["wv"]).reshape(B, N, num_heads, head_dim).transpose(0, 2, 1, 3)

    attn = jnp.einsum("bhnd,bhmd->bhnm", q, k) * scale
    if causal:
        i = jnp.arange(N)
        mask = i[None, :] > i[:, None]
        attn = jnp.where(mask[None, None], -jnp.finfo(attn.dtype).max, attn)
    attn = jax.nn.softmax(attn, axis=-1)
    o = jnp.einsum("bhnm,bhmd->bhnd", attn, v)
    o = o.transpose(0, 2, 1, 3).reshape(B, N, C)
    return lin(o, params["wo"], params["bo"])


# ---------------------------------------------------------------------------
# Main
# ---------------------------------------------------------------------------
if __name__ == "__main__":
    B, N, C = 2, 256, 256
    num_heads = 2

    key = jax.random.PRNGKey(0)
    kx, kq, kk, kv, ko, kb = jax.random.split(key, 6)

    x = jax.random.normal(kx, (B, N, C), dtype=jnp.float32)
    params = {
        "wq": jax.random.normal(kq, (C, C), dtype=jnp.float32) * 0.05,
        "wk": jax.random.normal(kk, (C, C), dtype=jnp.float32) * 0.05,
        "wv": jax.random.normal(kv, (C, C), dtype=jnp.float32) * 0.05,
        "wo": jax.random.normal(ko, (C, C), dtype=jnp.float32) * 0.05,
        "bo": jax.random.normal(kb, (C,), dtype=jnp.float32) * 0.05,
    }
    prepared = prepare_params(params, num_heads)

    for causal in (False, True):
        out = attention_forward(x, prepared, num_heads, causal=causal)
        out = jax.block_until_ready(out)
        ref = attention_reference(x, params, num_heads, causal=causal)
        np.testing.assert_allclose(
            np.asarray(out), np.asarray(ref), atol=1e-4, rtol=1e-4
        )

    print("KERNEL_OK")
</pallas_src>

<mosaic_0001>
module attributes {stable_mosaic.version = 11 : i64} {
  func.func @_linear_kernel(%arg0: i32, %arg1: i32, %arg2: i32, %arg3: memref<128x256xf32, #tpu.memory_space<vmem>>, %arg4: memref<256x128xf32, #tpu.memory_space<vmem>>, %arg5: memref<1x128xf32, #tpu.memory_space<vmem>>, %arg6: memref<128x128xf32, #tpu.memory_space<vmem>>, %arg7: memref<128x128xf32, #tpu.memory_space<vmem>>) attributes {dimension_semantics = [#tpu.dimension_semantics<parallel>, #tpu.dimension_semantics<parallel>, #tpu.dimension_semantics<arbitrary>], iteration_bounds = array<i64: 4, 6, 1>, scalar_prefetch = 0 : i64, scratch_operands = 1 : i64, tpu.core_type = #tpu.core_type<tc>, window_params = [{transform_indices = @transform_0, window_bounds = array<i64: 128, 256>}, {transform_indices = @transform_1, window_bounds = array<i64: 256, 128>}, {transform_indices = @transform_2, window_bounds = array<i64: 1, 128>}, {transform_indices = @transform_3, window_bounds = array<i64: 128, 128>}]} {
    %c0_i32 = arith.constant 0 : i32
    %0 = arith.cmpi eq, %arg2, %c0_i32 : i32
    %1 = arith.extui %0 : i1 to i32
    %c0_i32_0 = arith.constant 0 : i32
    %2 = arith.cmpi ne, %1, %c0_i32_0 : i32
    scf.if %2 {
      %cst_10 = arith.constant 0.000000e+00 : f32
      %12 = vector.broadcast %cst_10 : f32 to vector<128x128xf32>
      %c0_11 = arith.constant 0 : index
      %c0_12 = arith.constant 0 : index
      %13 = vector.load %arg7[%c0_11, %c0_12] : memref<128x128xf32, #tpu.memory_space<vmem>>, vector<128x128xf32>
      tpu.vector_store %arg7[%c0_11, %c0_12], %12 {strides = array<i32>} : memref<128x128xf32, #tpu.memory_space<vmem>>, vector<128x128xf32>,
    } else {
    }
    %c0 = arith.constant 0 : index
    %c0_1 = arith.constant 0 : index
    %3 = vector.load %arg7[%c0, %c0_1] : memref<128x128xf32, #tpu.memory_space<vmem>>, vector<128x128xf32>
    %c0_2 = arith.constant 0 : index
    %c0_3 = arith.constant 0 : index
    %4 = vector.load %arg3[%c0_2, %c0_3] : memref<128x256xf32, #tpu.memory_space<vmem>>, vector<128x256xf32>
    %c0_4 = arith.constant 0 : index
    %c0_5 = arith.constant 0 : index
    %5 = vector.load %arg4[%c0_4, %c0_5] : memref<256x128xf32, #tpu.memory_space<vmem>>, vector<256x128xf32>
    %cst = arith.constant dense<0.000000e+00> : vector<128x128xf32>
    %6 = tpu.matmul %4, %5, %cst {dimension_numbers = #tpu.dot_dimension_numbers<[1], [0], [0], [1], [0, 0, 1, 1], [], []>} : vector<128x256xf32>, vector<256x128xf32>, vector<128x128xf32> -> vector<128x128xf32>
    %7 = arith.addf %3, %6 : vector<128x128xf32>
    %c0_6 = arith.constant 0 : index
    %c0_7 = arith.constant 0 : index
    %8 = vector.load %arg7[%c0_6, %c0_7] : memref<128x128xf32, #tpu.memory_space<vmem>>, vector<128x128xf32>
    tpu.vector_store %arg7[%c0_6, %c0_7], %7 {strides = array<i32>} : memref<128x128xf32, #tpu.memory_space<vmem>>, vector<128x128xf32>,
    %c0_i32_8 = arith.constant 0 : i32
    %9 = arith.cmpi eq, %arg2, %c0_i32_8 : i32
    %10 = arith.extui %9 : i1 to i32
    %c0_i32_9 = arith.constant 0 : i32
    %11 = arith.cmpi ne, %10, %c0_i32_9 : i32
    scf.if %11 {
      %c0_10 = arith.constant 0 : index
      %c0_11 = arith.constant 0 : index
      %12 = vector.load %arg7[%c0_10, %c0_11] : memref<128x128xf32, #tpu.memory_space<vmem>>, vector<128x128xf32>
      %c0_12 = arith.constant 0 : index
      %c0_13 = arith.constant 0 : index
      %13 = vector.load %arg5[%c0_12, %c0_13] : memref<1x128xf32, #tpu.memory_space<vmem>>, vector<1x128xf32>
      %14 = vector.broadcast %13 : vector<1x128xf32> to vector<128x128xf32>
      %15 = arith.addf %12, %14 : vector<128x128xf32>
      %c0_14 = arith.constant 0 : index
      %c0_15 = arith.constant 0 : index
      %16 = vector.load %arg6[%c0_14, %c0_15] : memref<128x128xf32, #tpu.memory_space<vmem>>, vector<128x128xf32>
      tpu.vector_store %arg6[%c0_14, %c0_15], %15 {strides = array<i32>} : memref<128x128xf32, #tpu.memory_space<vmem>>, vector<128x128xf32>,
    } else {
    }
    return
  }
  func.func @transform_0(%arg0: i32, %arg1: i32, %arg2: i32) -> (i32, i32) {
    %c0_i32 = arith.constant 0 : i32
    return %arg0, %arg2 : i32, i32
  }
  func.func @transform_1(%arg0: i32, %arg1: i32, %arg2: i32) -> (i32, i32) {
    %c0_i32 = arith.constant 0 : i32
    return %arg2, %arg1 : i32, i32
  }
  func.func @transform_2(%arg0: i32, %arg1: i32, %arg2: i32) -> (i32, i32) {
    %c0_i32 = arith.constant 0 : i32
    %c0_i32_0 = arith.constant 0 : i32
    return %c0_i32, %arg1 : i32, i32
  }
  func.func @transform_3(%arg0: i32, %arg1: i32, %arg2: i32) -> (i32, i32) {
    %c0_i32 = arith.constant 0 : i32
    return %arg0, %arg1 : i32, i32
  }
}

</mosaic_0001>

<llo_original>
// kernel: tpu_custom_call.1
$region0: #{tpu_custom_call.1}
  #allocation0 [shape = 'u32[]', space=smem, size = 0x4, offset = 0x4, fixed_abs, tag = 'smem constant byte address 0x4 - core index']
  #allocation1 [shape = 'u32[144,128]{1,0:T(1,128)}', space=vmem, size = 0x12000, scoped, tag = 'internal scratch']
  #allocation2 [shape = 'f32[128,128]{1,0:T(8,128)}', space=vmem, size = 0x10000, scoped, tag = 'scratch operand']
  %s0 = inlined_call_operand.hbm [shape: f32[512,256], index: 0, kind: input, shape index: {}]
  %s1 = inlined_call_operand.hbm [shape: f32[256,768], index: 1, kind: input, shape index: {}]
  %s2 = inlined_call_operand.hbm [shape: f32[1,768], index: 2, kind: input, shape index: {}]
  %s3 = inlined_call_operand.hbm [shape: f32[512,768], index: 3, kind: output, shape index: {}]
  %s4 = sld [smem:[#allocation0]]
  $region65: #{tpu_custom_call.1} parent=0
    _
  %s6 = ssub.s32 1, %s4
  %s7 = scalar_select 0, %s6, %s4
  $region1: #{tpu_custom_call.1} parent=0
    #allocation3 [shape = 'u8[262144]{0}', space=vmem, size = 0x40000, scoped, tag = 'input window, operand 0']
    #allocation4 [shape = 's32[2]{0}', space=sflag, size = 0x8, scoped, tag = 'scoped memory for tpu_custom_call.1']
    #allocation5 [shape = 's32[2]{0}', space=sflag, size = 0x8, scoped, tag = 'scoped memory for tpu_custom_call.1']
    #allocation6 [shape = 'u8[262144]{0}', space=vmem, size = 0x40000, scoped, tag = 'input window, operand 1']
    #allocation7 [shape = 's32[2]{0}', space=sflag, size = 0x8, scoped, tag = 'scoped memory for tpu_custom_call.1']
    #allocation8 [shape = 'u8[1024]{0}', space=vmem, size = 0x400, scoped, tag = 'input window, operand 2']
    #allocation9 [shape = 'u8[131072]{0}', space=vmem, size = 0x20000, scoped, tag = 'output window, operand 0']
    %8 = vsyncpa [#allocation4], 0
    %s9 = scalar_lea.sflag [#allocation4], 1
    %10 = vsyncpa %s9, 0
    %11 = vsyncpa [#allocation7], 0
    %s12 = scalar_lea.sflag [#allocation7], 1
    %13 = vsyncpa %s12, 0
    %14 = vsyncpa [#allocation5], 0
    %s15 = scalar_lea.sflag [#allocation5], 1
    %16 = vsyncpa %s15, 0
    loop: start=0, step=1, limit=26
    $region2: #{tpu_custom_call.1} parent=1 // loop_pre_header
      _
    $region3: #{tpu_custom_call.1} parent=1 // loop_header
      %s18 = sphi 0, %s22
      %p19 = scmp.ge.s32.totalorder %s18, 26
      %s25 = sphi 0, %s44
      %s26 = sphi 0, %s40
      %s27 = sphi 0, %s36
      %s28 = sphi 0, %s25
      %s29 = sphi 0, %s26
      %s30 = sphi 0, %s27
      %s31 = sphi 0, %s28
      %s32 = sphi 0, %s29
      %s33 = sphi 0, %s30
      %s49 = sphi 0, %s51
      %s52 = sphi 0, %s49
      %s53 = sphi 0, %s52
      %s69 = sphi 0, %s53
      %s77 = sphi 0, %s79
      %s80 = sphi 0, %s77
      %s81 = sphi 0, %s80
      %s97 = sphi 0, %s81
      %s103 = sphi 0, %s105
      %s106 = sphi 0, %s103
      %s107 = sphi 0, %s106
      %s123 = sphi 0, %s107
      %s131 = sphi 0, %s133
      %s134 = sphi 0, %s131
      %s135 = sphi 0, %s134
      %s151 = sphi 0, %s135
    $region4: #{tpu_custom_call.1} parent=1 // loop_header_branch
      %21 = sbr.rel (%p19) target = $region8
    $region5: #{tpu_custom_call.1} parent=1 // loop_body
      %s23 = ssub.s32 %s18, 1
      %s24 = ssub.s32 %s18, 2
      %s34 = sadd.s32 1, %s27
      %p35 = scmp.ge.s32.totalorder %s34, 1
      %s36 = scalar_select %p35, 0, %s34
      %s37 = sadd.s32 1, %s26
      %s38 = scalar_select %p35, %s37, %s26
      %p39 = scmp.ge.s32.totalorder %s38, 6
      %s40 = scalar_select %p39, 0, %s38
      %s41 = sadd.s32 1, %s25
      %s42 = scalar_select %p39, %s41, %s25
      %p43 = scmp.ge.s32.totalorder %s42, 4
      %s44 = scalar_select %p43, 0, %s42
      %s45 = ssub.s32 %s25, %s44
      %s46 = ssub.s32 %s27, %s36
      %s47 = sor.u32 %s45, %s46
      %p48 = scmp.eq.s32.totalorder %s47, 0
      %s50 = sadd.s32 %s49, 1
      %s51 = scalar_select %p48, %s49, %s50
      %p54 = pneg %p48
      %p55 = scmp.eq.s32.totalorder %s18, 23
      %p56 = por %p54, %p55
      %p57 = scmp.ne.s32.totalorder %s49, %s52
      %p58 = scmp.eq.s32.totalorder %s18, 0
      %p59 = por %p57, %p58
      %p60 = scmp.ne.s32.totalorder %s49, %s52
      %p61 = scmp.eq.s32.totalorder %s23, 23
      %p62 = por %p60, %p61
      %p63 = scmp.ne.s32.totalorder %s52, %s53
      %p64 = scmp.eq.s32.totalorder %s23, 0
      %p65 = por %p63, %p64
      %p66 = scmp.ne.s32.totalorder %s52, %s53
      %p67 = scmp.eq.s32.totalorder %s24, 23
      %p68 = por %p66, %p67
      %p70 = scmp.ne.s32.totalorder %s53, %s69
      %p71 = scmp.eq.s32.totalorder %s24, 0
      %p72 = por %p70, %p71
      %s73 = ssub.s32 %s27, %s36
      %s74 = ssub.s32 %s26, %s40
      %s75 = sor.u32 %s73, %s74
      %p76 = scmp.eq.s32.totalorder %s75, 0
      %s78 = sadd.s32 %s77, 1
      %s79 = scalar_select %p76, %s77, %s78
      %p82 = pneg %p76
      %p83 = scmp.eq.s32.totalorder %s18, 23
      %p84 = por %p82, %p83
      %p85 = scmp.ne.s32.totalorder %s77, %s80
      %p86 = scmp.eq.s32.totalorder %s18, 0
      %p87 = por %p85, %p86
      %p88 = scmp.ne.s32.totalorder %s77, %s80
      %p89 = scmp.eq.s32.totalorder %s23, 23
      %p90 = por %p88, %p89
      %p91 = scmp.ne.s32.totalorder %s80, %s81
      %p92 = scmp.eq.s32.totalorder %s23, 0
      %p93 = por %p91, %p92
      %p94 = scmp.ne.s32.totalorder %s80, %s81
      %p95 = scmp.eq.s32.totalorder %s24, 23
      %p96 = por %p94, %p95
      %p98 = scmp.ne.s32.totalorder %s81, %s97
      %p99 = scmp.eq.s32.totalorder %s24, 0
      %p100 = por %p98, %p99
      %s101 = ssub.s32 %s26, %s40
      %p102 = scmp.eq.s32.totalorder %s101, 0
      %s104 = sadd.s32 %s103, 1
      %s105 = scalar_select %p102, %s103, %s104
      %p108 = pneg %p102
      %p109 = scmp.eq.s32.totalorder %s18, 23
      %p110 = por %p108, %p109
      %p111 = scmp.ne.s32.totalorder %s103, %s106
      %p112 = scmp.eq.s32.totalorder %s18, 0
      %p113 = por %p111, %p112
      %p114 = scmp.ne.s32.totalorder %s103, %s106
      %p115 = scmp.eq.s32.totalorder %s23, 23
      %p116 = por %p114, %p115
      %p117 = scmp.ne.s32.totalorder %s106, %s107
      %p118 = scmp.eq.s32.totalorder %s23, 0
      %p119 = por %p117, %p118
      %p120 = scmp.ne.s32.totalorder %s106, %s107
      %p121 = scmp.eq.s32.totalorder %s24, 23
      %p122 = por %p120, %p121
      %p124 = scmp.ne.s32.totalorder %s107, %s123
      %p125 = scmp.eq.s32.totalorder %s24, 0
      %p126 = por %p124, %p125
      %s127 = ssub.s32 %s25, %s44
      %s128 = ssub.s32 %s26, %s40
      %s129 = sor.u32 %s127, %s128
      %p130 = scmp.eq.s32.totalorder %s129, 0
      %s132 = sadd.s32 %s131, 1
      %s133 = scalar_select %p130, %s131, %s132
      %p136 = pneg %p130
      %p137 = scmp.eq.s32.totalorder %s18, 23
      %p138 = por %p136, %p137
      %p139 = scmp.ne.s32.totalorder %s131, %s134
      %p140 = scmp.eq.s32.totalorder %s18, 0
      %p141 = por %p139, %p140
      %p142 = scmp.ne.s32.totalorder %s131, %s134
      %p143 = scmp.eq.s32.totalorder %s23, 23
      %p144 = por %p142, %p143
      %p145 = scmp.ne.s32.totalorder %s134, %s135
      %p146 = scmp.eq.s32.totalorder %s23, 0
      %p147 = por %p145, %p146
      %p148 = scmp.ne.s32.totalorder %s134, %s135
      %p149 = scmp.eq.s32.totalorder %s24, 23
      %p150 = por %p148, %p149
      %p152 = scmp.ne.s32.totalorder %s135, %s151
      %p153 = scmp.eq.s32.totalorder %s24, 0
      %p154 = por %p152, %p153
      %p155 = scmp.le.s32.totalorder 1, %s18
      %p156 = scmp.lt.s32.totalorder %s18, 25
      %p157 = pnand %p155, %p156
      %p158 = pneg %p157
      // Predicated region
      $region9: #{tpu_custom_call.1} parent=5 // pred_check
        _
      $region10: #{tpu_custom_call.1} parent=5 // pred_check_branch
        %160 = sbr.rel (%p157) target = $region12
      $region11: #{tpu_custom_call.1} parent=5 // pred_region
        %s161 = ssub.s32 %s18, 1
      $region12: #{tpu_custom_call.1} parent=5 // pred_fallthru
        _
      %p162 = scmp.lt.s32.totalorder %s18, 24
      // Predicated region
      $region13: #{tpu_custom_call.1} parent=5 // pred_check
        %p163 = pneg %p162
      $region14: #{tpu_custom_call.1} parent=5 // pred_check_branch
        %165 = sbr.rel (%p163) target = $region16
      $region15: #{tpu_custom_call.1} parent=5 // pred_region
        // Predicated region
        $region17: #{tpu_custom_call.1} parent=15 // pred_check
          %p166 = pneg %p59
        $region18: #{tpu_custom_call.1} parent=15 // pred_check_branch
          %168 = sbr.rel (%p166) target = $region20
        $region19: #{tpu_custom_call.1} parent=15 // pred_region
          %s169 = sand.u32 %s49, 1
          %s170 = scalar_lea.sflag [#allocation4], %s169
          %s171 = sand.u32 %s49, 1
          %s172 = smul.addr %s171, 256
          %s173 = scalar_lea.vmem [#allocation3], %s172
          %s174 = smul.u32 16, %s25
          %s175 = smul.u32 2, %s27
          %s177 = ssub.s32 4096, 4096
          %178 = vsyncadd %s170, %s177
          %s179 = smul.addr %s174, 2
          %s180 = sadd.s32 %s175, %s179
          %s181 = smul.addr %s180, 128
          %s182 = scalar_lea.hbm %s0, %s181
          %s183 = sshll.u32 %s173, 4
          %s184 = int_to_ptr.vmem [resolvable:$true] %s183
          %189 = dma.hbm_to_vmem [thread:$0]  %s182, 4096, %s184, %s170, 256, 256, 16
        $region20: #{tpu_custom_call.1} parent=15 // pred_fallthru
          _
        // Predicated region
        $region21: #{tpu_custom_call.1} parent=15 // pred_check
          %p190 = pneg %p87
        $region22: #{tpu_custom_call.1} parent=15 // pred_check_branch
          %192 = sbr.rel (%p190) target = $region24
        $region23: #{tpu_custom_call.1} parent=15 // pred_region
          %s193 = sand.u32 %s18, 1
          %s194 = scalar_lea.sflag [#allocation7], %s193
          %s195 = sand.u32 %s77, 1
          %s196 = smul.addr %s195, 256
          %s197 = scalar_lea.vmem [#allocation6], %s196
          %s198 = smul.u32 32, %s27
          %s200 = ssub.s32 4096, 4096
          %201 = vsyncadd %s194, %s200
          %s202 = smul.addr %s198, 6
          %s203 = sadd.s32 %s26, %s202
          %s204 = smul.addr %s203, 128
          %s205 = scalar_lea.hbm %s1, %s204
          %s206 = sshll.u32 %s197, 4
          %s207 = int_to_ptr.vmem [resolvable:$true] %s206
          %212 = dma.hbm_to_vmem [thread:$0]  %s205, 4096, %s207, %s194, 768, 128, 8
        $region24: #{tpu_custom_call.1} parent=15 // pred_fallthru
          _
        // Predicated region
        $region25: #{tpu_custom_call.1} parent=15 // pred_check
          %p213 = pneg %p113
        $region26: #{tpu_custom_call.1} parent=15 // pred_check_branch
          %215 = sbr.rel (%p213) target = $region28
        $region27: #{tpu_custom_call.1} parent=15 // pred_region
          %s216 = sand.u32 %s18, 1
          %s217 = scalar_lea.sflag [#allocation7], %s216
          %s218 = sand.u32 %s103, 1
          %s219 = scalar_lea.vmem [#allocation8], %s218
          %s221 = ssub.s32 16, 16
          %222 = vsyncadd %s217, %s221
          %s223 = smul.addr %s26, 16
          %s224 = scalar_lea.hbm %s2, %s223
          %s226 = sshll.u32 %s219, 4
          %s227 = int_to_ptr.vmem [resolvable:$true] %s226
          %229 = dma.hbm_to_vmem [thread:$0]  %s224, 16, %s227, %s217
        $region28: #{tpu_custom_call.1} parent=15 // pred_fallthru
          _
      $region16: #{tpu_custom_call.1} parent=5 // pred_fallthru
        _
      %p230 = scmp.le.s32.totalorder 1, %s18
      %p231 = scmp.lt.s32.totalorder %s18, 25
      %p232 = pnand %p230, %p231
      %p233 = pneg %p232
      // Predicated region
      $region29: #{tpu_custom_call.1} parent=5 // pred_check
        _
      $region30: #{tpu_custom_call.1} parent=5 // pred_check_branch
        %235 = sbr.rel (%p232) target = $region32
      $region31: #{tpu_custom_call.1} parent=5 // pred_region
        %s236 = ssub.s32 %s18, 1
        %s237 = sand.u32 %s52, 1
        %s238 = scalar_lea.sflag [#allocation4], %s237
        %s239 = sand.u32 %s52, 1
        %s240 = smul.addr %s239, 256
        %s241 = scalar_lea.vmem [#allocation3], %s240
        // Predicated region
        $region33: #{tpu_custom_call.1} parent=31 // pred_check
          %p242 = pneg %p65
        $region34: #{tpu_custom_call.1} parent=31 // pred_check_branch
          %244 = sbr.rel (%p242) target = $region36
        $region35: #{tpu_custom_call.1} parent=31 // pred_region
          %245 = dma.done %s238, 4096
        $region36: #{tpu_custom_call.1} parent=31 // pred_fallthru
          _
        %s246 = sand.u32 %s23, 1
        %s247 = scalar_lea.sflag [#allocation7], %s246
        %s248 = sand.u32 %s80, 1
        %s249 = smul.addr %s248, 256
        %s250 = scalar_lea.vmem [#allocation6], %s249
        // Predicated region
        $region37: #{tpu_custom_call.1} parent=31 // pred_check
          %p251 = pneg %p93
        $region38: #{tpu_custom_call.1} parent=31 // pred_check_branch
          %253 = sbr.rel (%p251) target = $region40
        $region39: #{tpu_custom_call.1} parent=31 // pred_region
          %254 = dma.done %s247, 4096
        $region40: #{tpu_custom_call.1} parent=31 // pred_fallthru
          _
        %s255 = sand.u32 %s23, 1
        %s256 = scalar_lea.sflag [#allocation7], %s255
        %s257 = sand.u32 %s106, 1
        %s258 = scalar_lea.vmem [#allocation8], %s257
        // Predicated region
        $region41: #{tpu_custom_call.1} parent=31 // pred_check
          %p259 = pneg %p119
        $region42: #{tpu_custom_call.1} parent=31 // pred_check_branch
          %261 = sbr.rel (%p259) target = $region44
        $region43: #{tpu_custom_call.1} parent=31 // pred_region
          %262 = dma.done %s256, 16
        $region44: #{tpu_custom_call.1} parent=31 // pred_fallthru
          _
        %s263 = sand.u32 %s52, 1
        %s264 = scalar_lea.sflag [#allocation4], %s263
        %s265 = sand.u32 %s52, 1
        %s266 = smul.addr %s265, 256
        %s267 = scalar_lea.vmem [#allocation3], %s266
        %p268 = pneg %p65
        %p269 = pneg %p62
        %s270 = sand.u32 %s23, 1
        %s271 = scalar_lea.sflag [#allocation7], %s270
        %s272 = sand.u32 %s80, 1
        %s273 = smul.addr %s272, 256
        %s274 = scalar_lea.vmem [#allocation6], %s273
        %p275 = pneg %p93
        %p276 = pneg %p90
        %s277 = sand.u32 %s23, 1
        %s278 = scalar_lea.sflag [#allocation7], %s277
        %s279 = sand.u32 %s106, 1
        %s280 = scalar_lea.vmem [#allocation8], %s279
        %p281 = pneg %p119
        %p282 = pneg %p116
        %p283 = pneg %p147
        %p284 = pneg %p144
        %s285 = sand.u32 %s134, 1
        %s286 = scalar_lea.sflag [#allocation5], %s285
        %s287 = sand.u32 %s134, 1
        %s288 = smul.addr %s287, 128
        %s289 = scalar_lea.vmem [#allocation9], %s288
        %s290 = smul.u32 16, %s28
        %s291 = smul.u32 2, %s30
        %s292 = smul.u32 32, %s30
        %s293 = smul.u32 16, %s28
        %p294 = scmp.eq.s32.totalorder %s30, 0
        // Predicated region
        $region45: #{tpu_custom_call.1} parent=31 // pred_check
          %p295 = pneg %p294
        $region46: #{tpu_custom_call.1} parent=31 // pred_check_branch
          %297 = sbr.rel (%p295) target = $region48
        $region47: #{tpu_custom_call.1} parent=31 // pred_region
          %298 = vst [vmem:[#allocation2] sm:$0xff] 0.0
          %299 = vst [vmem:[#allocation2 + $0x8] sm:$0xff] 0.0
          %300 = vst [vmem:[#allocation2 + $0x10] sm:$0xff] 0.0
          %301 = vst [vmem:[#allocation2 + $0x18] sm:$0xff] 0.0
          %302 = vst [vmem:[#allocation2 + $0x20] sm:$0xff] 0.0
          %303 = vst [vmem:[#allocation2 + $0x28] sm:$0xff] 0.0
          %304 = vst [vmem:[#allocation2 + $0x30] sm:$0xff] 0.0
          %305 = vst [vmem:[#allocation2 + $0x38] sm:$0xff] 0.0
          %306 = vst [vmem:[#allocation2 + $0x40] sm:$0xff] 0.0
          %307 = vst [vmem:[#allocation2 + $0x48] sm:$0xff] 0.0
          %308 = vst [vmem:[#allocation2 + $0x50] sm:$0xff] 0.0
          %309 = vst [vmem:[#allocation2 + $0x58] sm:$0xff] 0.0
          %310 = vst [vmem:[#allocation2 + $0x60] sm:$0xff] 0.0
          %311 = vst [vmem:[#allocation2 + $0x68] sm:$0xff] 0.0
          %312 = vst [vmem:[#allocation2 + $0x70] sm:$0xff] 0.0
          %313 = vst [vmem:[#allocation2 + $0x78] sm:$0xff] 0.0
        $region48: #{tpu_custom_call.1} parent=31 // pred_fallthru
          _
        %v314 = vld [vmem:[#allocation2] sm:$0xff]
        %v315 = vld [vmem:[#allocation2 + $0x8] sm:$0xff]
        %v316 = vld [vmem:[#allocation2 + $0x10] sm:$0xff]
        %v317 = vld [vmem:[#allocation2 + $0x18] sm:$0xff]
        %v318 = vld [vmem:[#allocation2 + $0x20] sm:$0xff]
        %v319 = vld [vmem:[#allocation2 + $0x28] sm:$0xff]
        %v320 = vld [vmem:[#allocation2 + $0x30] sm:$0xff]
        %v321 = vld [vmem:[#allocation2 + $0x38] sm:$0xff]
        %v322 = vld [vmem:[#allocation2 + $0x40] sm:$0xff]
        %v323 = vld [vmem:[#allocation2 + $0x48] sm:$0xff]
        %v324 = vld [vmem:[#allocation2 + $0x50] sm:$0xff]
        %v325 = vld [vmem:[#allocation2 + $0x58] sm:$0xff]
        %v326 = vld [vmem:[#allocation2 + $0x60] sm:$0xff]
        %v327 = vld [vmem:[#allocation2 + $0x68] sm:$0xff]
        %v328 = vld [vmem:[#allocation2 + $0x70] sm:$0xff]
        %v329 = vld [vmem:[#allocation2 + $0x78] sm:$0xff]
        %v330 = vld [vmem:[%s241] sm:$0xff]
        %v331 = vld [vmem:[%s241 + $0x8] sm:$0xff]
        %v332 = vld [vmem:[%s241 + $0x10] sm:$0xff]
        %v333 = vld [vmem:[%s241 + $0x18] sm:$0xff]
        %v334 = vld [vmem:[%s241 + $0x20] sm:$0xff]
        %v335 = vld [vmem:[%s241 + $0x28] sm:$0xff]
        %v336 = vld [vmem:[%s241 + $0x30] sm:$0xff]
        %v337 = vld [vmem:[%s241 + $0x38] sm:$0xff]
        %v338 = vld [vmem:[%s241 + $0x40] sm:$0xff]
        %v339 = vld [vmem:[%s241 + $0x48] sm:$0xff]
        %v340 = vld [vmem:[%s241 + $0x50] sm:$0xff]
        %v341 = vld [vmem:[%s241 + $0x58] sm:$0xff]
        %v342 = vld [vmem:[%s241 + $0x60] sm:$0xff]
        %v343 = vld [vmem:[%s241 + $0x68] sm:$0xff]
        %v344 = vld [vmem:[%s241 + $0x70] sm:$0xff]
        %v345 = vld [vmem:[%s241 + $0x78] sm:$0xff]
        %v346 = vld [vmem:[%s241 + $0x80] sm:$0xff]
        %v347 = vld [vmem:[%s241 + $0x88] sm:$0xff]
        %v348 = vld [vmem:[%s241 + $0x90] sm:$0xff]
        %v349 = vld [vmem:[%s241 + $0x98] sm:$0xff]
        %v350 = vld [vmem:[%s241 + $0xa0] sm:$0xff]
        %v351 = vld [vmem:[%s241 + $0xa8] sm:$0xff]
        %v352 = vld [vmem:[%s241 + $0xb0] sm:$0xff]
        %v353 = vld [vmem:[%s241 + $0xb8] sm:$0xff]
        %v354 = vld [vmem:[%s241 + $0xc0] sm:$0xff]
        %v355 = vld [vmem:[%s241 + $0xc8] sm:$0xff]
        %v356 = vld [vmem:[%s241 + $0xd0] sm:$0xff]
        %v357 = vld [vmem:[%s241 + $0xd8] sm:$0xff]
        %v358 = vld [vmem:[%s241 + $0xe0] sm:$0xff]
        %v359 = vld [vmem:[%s241 + $0xe8] sm:$0xff]
        %v360 = vld [vmem:[%s241 + $0xf0] sm:$0xff]
        %v361 = vld [vmem:[%s241 + $0xf8] sm:$0xff]
        %v362 = vld [vmem:[%s250] sm:$0xff]
        %v363 = vld [vmem:[%s250 + $0x8] sm:$0xff]
        %v364 = vld [vmem:[%s250 + $0x10] sm:$0xff]
        %v365 = vld [vmem:[%s250 + $0x18] sm:$0xff]
        %v366 = vld [vmem:[%s250 + $0x20] sm:$0xff]
        %v367 = vld [vmem:[%s250 + $0x28] sm:$0xff]
        %v368 = vld [vmem:[%s250 + $0x30] sm:$0xff]
        %v369 = vld [vmem:[%s250 + $0x38] sm:$0xff]
        %v370 = vld [vmem:[%s250 + $0x40] sm:$0xff]
        %v371 = vld [vmem:[%s250 + $0x48] sm:$0xff]
        %v372 = vld [vmem:[%s250 + $0x50] sm:$0xff]
        %v373 = vld [vmem:[%s250 + $0x58] sm:$0xff]
        %v374 = vld [vmem:[%s250 + $0x60] sm:$0xff]
        %v375 = vld [vmem:[%s250 + $0x68] sm:$0xff]
        %v376 = vld [vmem:[%s250 + $0x70] sm:$0xff]
        %v377 = vld [vmem:[%s250 + $0x78] sm:$0xff]
        %v378 = vld [vmem:[%s250 + $0x80] sm:$0xff]
        %v379 = vld [vmem:[%s250 + $0x88] sm:$0xff]
        %v380 = vld [vmem:[%s250 + $0x90] sm:$0xff]
        %v381 = vld [vmem:[%s250 + $0x98] sm:$0xff]
        %v382 = vld [vmem:[%s250 + $0xa0] sm:$0xff]
        %v383 = vld [vmem:[%s250 + $0xa8] sm:$0xff]
        %v384 = vld [vmem:[%s250 + $0xb0] sm:$0xff]
        %v385 = vld [vmem:[%s250 + $0xb8] sm:$0xff]
        %v386 = vld [vmem:[%s250 + $0xc0] sm:$0xff]
        %v387 = vld [vmem:[%s250 + $0xc8] sm:$0xff]
        %v388 = vld [vmem:[%s250 + $0xd0] sm:$0xff]
        %v389 = vld [vmem:[%s250 + $0xd8] sm:$0xff]
        %v390 = vld [vmem:[%s250 + $0xe0] sm:$0xff]
        %v391 = vld [vmem:[%s250 + $0xe8] sm:$0xff]
        %v392 = vld [vmem:[%s250 + $0xf0] sm:$0xff]
        %v393 = vld [vmem:[%s250 + $0xf8] sm:$0xff]
        %394 = vmatprep.subr.mxu0 0.0
        %395 = vmatpush1.msra.mxu0 %v362
        %396 = vmatprep.subr.mxu0 0.0
        %397 = vmatpush1.msra.mxu0 %v363
        %398 = vmatprep.subr.mxu0 0.0
        %399 = vmatpush1.msra.mxu0 %v364
        %400 = vmatprep.subr.mxu0 0.0
        %401 = vmatpush1.msra.mxu0 %v365
        %402 = vmatprep.subr.mxu0 0.0
        %403 = vmatpush1.msra.mxu0 %v366
        %404 = vmatprep.subr.mxu0 0.0
        %405 = vmatpush1.msra.mxu0 %v367
        %406 = vmatprep.subr.mxu0 0.0
        %407 = vmatpush1.msra.mxu0 %v368
        %408 = vmatprep.subr.mxu0 0.0
        %409 = vmatpush1.msra.mxu0 %v369
        %410 = vmatprep.subr.mxu0 0.0
        %411 = vmatpush1.msra.mxu0 %v370
        %412 = vmatprep.subr.mxu0 0.0
        %413 = vmatpush1.msra.mxu0 %v371
        %414 = vmatprep.subr.mxu0 0.0
        %415 = vmatpush1.msra.mxu0 %v372
        %416 = vmatprep.subr.mxu0 0.0
        %417 = vmatpush1.msra.mxu0 %v373
        %418 = vmatprep.subr.mxu0 0.0
        %419 = vmatpush1.msra.mxu0 %v374
        %420 = vmatprep.subr.mxu0 0.0
        %421 = vmatpush1.msra.mxu0 %v375
        %422 = vmatprep.subr.mxu0 0.0
        %423 = vmatpush1.msra.mxu0 %v376
        %424 = vmatprep.subr.mxu0 0.0
        %425 = vmatpush1.msra.mxu0 %v377
        %426 = vmatprep.subr.mxu0 0.0
        %427 = vmatpush1.msra.mxu0 %v378
        %428 = vmatprep.subr.mxu0 0.0
        %429 = vmatpush1.msra.mxu0 %v379
        %430 = vmatprep.subr.mxu0 0.0
        %431 = vmatpush1.msra.mxu0 %v380
        %432 = vmatprep.subr.mxu0 0.0
        %433 = vmatpush1.msra.mxu0 %v381
        %434 = vmatprep.subr.mxu0 0.0
        %435 = vmatpush1.msra.mxu0 %v382
        %436 = vmatprep.subr.mxu0 0.0
        %437 = vmatpush1.msra.mxu0 %v383
        %438 = vmatprep.subr.mxu0 0.0
        %439 = vmatpush1.msra.mxu0 %v384
        %440 = vmatprep.subr.mxu0 0.0
        %441 = vmatpush1.msra.mxu0 %v385
        %442 = vmatprep.subr.mxu0 0.0
        %443 = vmatpush1.msra.mxu0 %v386
        %444 = vmatprep.subr.mxu0 0.0
        %445 = vmatpush1.msra.mxu0 %v387
        %446 = vmatprep.subr.mxu0 0.0
        %447 = vmatpush1.msra.mxu0 %v388
        %448 = vmatprep.subr.mxu0 0.0
        %449 = vmatpush1.msra.mxu0 %v389
        %450 = vmatprep.subr.mxu0 0.0
        %451 = vmatpush1.msra.mxu0 %v390
        %452 = vmatprep.subr.mxu0 0.0
        %453 = vmatpush1.msra.mxu0 %v391
        %454 = vmatprep.subr.mxu0 0.0
        %455 = vmatpush1.msra.mxu0 %v392
        %456 = vmatprep.subr.mxu0 0.0
        %457 = vmatpush1.msra.mxu0 %v393
        %458 = vmatprep.mubr.f32.mxu0 %v331
        %459 = vmatmul.mubr.f32.gmra.mrb[0].mxu0 %v330
        %v460 = vpop.f32.mrb[0].mxu0
        %v461 = vadd.f32 0.0, %v460
        %v462 = vpop.f32.mrb[0].mxu0
        %463 = vmatprep.mubr.f32.mxu0 %v333
        %464 = vmatmul.mubr.f32.gmra.mrb[0].mxu0 %v332
        %v465 = vpop.f32.mrb[0].mxu0
        %v466 = vadd.f32 0.0, %v465
        %v467 = vpop.f32.mrb[0].mxu0
        %468 = vmatprep.mubr.f32.mxu0 %v335
        %469 = vmatmul.mubr.f32.gmra.mrb[0].mxu0 %v334
        %v470 = vpop.f32.mrb[0].mxu0
        %v471 = vadd.f32 0.0, %v470
        %v472 = vpop.f32.mrb[0].mxu0
        %473 = vmatprep.mubr.f32.mxu0 %v337
        %474 = vmatmul.mubr.f32.gmra.mrb[0].mxu0 %v336
        %v475 = vpop.f32.mrb[0].mxu0
        %v476 = vadd.f32 0.0, %v475
        %v477 = vpop.f32.mrb[0].mxu0
        %478 = vmatprep.mubr.f32.mxu0 %v339
        %479 = vmatmul.mubr.f32.gmra.mrb[0].mxu0 %v338
        %v480 = vpop.f32.mrb[0].mxu0
        %v481 = vadd.f32 0.0, %v480
        %v482 = vpop.f32.mrb[0].mxu0
        %483 = vmatprep.mubr.f32.mxu0 %v341
        %484 = vmatmul.mubr.f32.gmra.mrb[0].mxu0 %v340
        %v485 = vpop.f32.mrb[0].mxu0
        %v486 = vadd.f32 0.0, %v485
        %v487 = vpop.f32.mrb[0].mxu0
        %488 = vmatprep.mubr.f32.mxu0 %v343
        %489 = vmatmul.mubr.f32.gmra.mrb[0].mxu0 %v342
        %v490 = vpop.f32.mrb[0].mxu0
        %v491 = vadd.f32 0.0, %v490
        %v492 = vpop.f32.mrb[0].mxu0
        %493 = vmatprep.mubr.f32.mxu0 %v345
        %494 = vmatmul.mubr.f32.gmra.mrb[0].mxu0 %v344
        %v495 = vpop.f32.mrb[0].mxu0
        %v496 = vadd.f32 0.0, %v495
        %v497 = vpop.f32.mrb[0].mxu0
        %498 = vmatprep.mubr.f32.mxu0 %v347
        %499 = vmatmul.mubr.f32.gmra.mrb[0].mxu0 %v346
        %v500 = vpop.f32.mrb[0].mxu0
        %v501 = vadd.f32 0.0, %v500
        %v502 = vpop.f32.mrb[0].mxu0
        %503 = vmatprep.mubr.f32.mxu0 %v349
        %504 = vmatmul.mubr.f32.gmra.mrb[0].mxu0 %v348
        %v505 = vpop.f32.mrb[0].mxu0
        %v506 = vadd.f32 0.0, %v505
        %v507 = vpop.f32.mrb[0].mxu0
        %508 = vmatprep.mubr.f32.mxu0 %v351
        %509 = vmatmul.mubr.f32.gmra.mrb[0].mxu0 %v350
        %v510 = vpop.f32.mrb[0].mxu0
        %v511 = vadd.f32 0.0, %v510
        %v512 = vpop.f32.mrb[0].mxu0
        %513 = vmatprep.mubr.f32.mxu0 %v353
        %514 = vmatmul.mubr.f32.gmra.mrb[0].mxu0 %v352
        %v515 = vpop.f32.mrb[0].mxu0
        %v516 = vadd.f32 0.0, %v515
        %v517 = vpop.f32.mrb[0].mxu0
        %518 = vmatprep.mubr.f32.mxu0 %v355
        %519 = vmatmul.mubr.f32.gmra.mrb[0].mxu0 %v354
        %v520 = vpop.f32.mrb[0].mxu0
        %v521 = vadd.f32 0.0, %v520
        %v522 = vpop.f32.mrb[0].mxu0
        %523 = vmatprep.mubr.f32.mxu0 %v357
        %524 = vmatmul.mubr.f32.gmra.mrb[0].mxu0 %v356
        %v525 = vpop.f32.mrb[0].mxu0
        %v526 = vadd.f32 0.0, %v525
        %v527 = vpop.f32.mrb[0].mxu0
        %528 = vmatprep.mubr.f32.mxu0 %v359
        %529 = vmatmul.mubr.f32.gmra.mrb[0].mxu0 %v358
        %v530 = vpop.f32.mrb[0].mxu0
        %v531 = vadd.f32 0.0, %v530
        %v532 = vpop.f32.mrb[0].mxu0
        %533 = vmatprep.mubr.f32.mxu0 %v361
        %534 = vmatmul.mubr.f32.gmra.mrb[0].mxu0 %v360
        %v535 = vpop.f32.mrb[0].mxu0
        %v536 = vadd.f32 0.0, %v535
        %v537 = vpop.f32.mrb[0].mxu0
        %538 = vdwg.mxu0
        %v539 = vadd.f32 %v314, %v461
        %v540 = vadd.f32 %v315, %v466
        %v541 = vadd.f32 %v316, %v471
        %v542 = vadd.f32 %v317, %v476
        %v543 = vadd.f32 %v318, %v481
        %v544 = vadd.f32 %v319, %v486
        %v545 = vadd.f32 %v320, %v491
        %v546 = vadd.f32 %v321, %v496
        %v547 = vadd.f32 %v322, %v501
        %v548 = vadd.f32 %v323, %v506
        %v549 = vadd.f32 %v324, %v511
        %v550 = vadd.f32 %v325, %v516
        %v551 = vadd.f32 %v326, %v521
        %v552 = vadd.f32 %v327, %v526
        %v553 = vadd.f32 %v328, %v531
        %v554 = vadd.f32 %v329, %v536
        %555 = vst [vmem:[#allocation2] sm:$0xff] %v539
        %556 = vst [vmem:[#allocation2 + $0x8] sm:$0xff] %v540
        %557 = vst [vmem:[#allocation2 + $0x10] sm:$0xff] %v541
        %558 = vst [vmem:[#allocation2 + $0x18] sm:$0xff] %v542
        %559 = vst [vmem:[#allocation2 + $0x20] sm:$0xff] %v543
        %560 = vst [vmem:[#allocation2 + $0x28] sm:$0xff] %v544
        %561 = vst [vmem:[#allocation2 + $0x30] sm:$0xff] %v545
        %562 = vst [vmem:[#allocation2 + $0x38] sm:$0xff] %v546
        %563 = vst [vmem:[#allocation2 + $0x40] sm:$0xff] %v547
        %564 = vst [vmem:[#allocation2 + $0x48] sm:$0xff] %v548
        %565 = vst [vmem:[#allocation2 + $0x50] sm:$0xff] %v549
        %566 = vst [vmem:[#allocation2 + $0x58] sm:$0xff] %v550
        %567 = vst [vmem:[#allocation2 + $0x60] sm:$0xff] %v551
        %568 = vst [vmem:[#allocation2 + $0x68] sm:$0xff] %v552
        %569 = vst [vmem:[#allocation2 + $0x70] sm:$0xff] %v553
        %570 = vst [vmem:[#allocation2 + $0x78] sm:$0xff] %v554
        // Predicated region
        $region49: #{tpu_custom_call.1} parent=31 // pred_check
          %p571 = pneg %p294
        $region50: #{tpu_custom_call.1} parent=31 // pred_check_branch
          %573 = sbr.rel (%p571) target = $region52
        $region51: #{tpu_custom_call.1} parent=31 // pred_region
          %v574 = vld [vmem:[#allocation2] sm:$0xff]
          %v575 = vld [vmem:[#allocation2 + $0x8] sm:$0xff]
          %v576 = vld [vmem:[#allocation2 + $0x10] sm:$0xff]
          %v577 = vld [vmem:[#allocation2 + $0x18] sm:$0xff]
          %v578 = vld [vmem:[#allocation2 + $0x20] sm:$0xff]
          %v579 = vld [vmem:[#allocation2 + $0x28] sm:$0xff]
          %v580 = vld [vmem:[#allocation2 + $0x30] sm:$0xff]
          %v581 = vld [vmem:[#allocation2 + $0x38] sm:$0xff]
          %v582 = vld [vmem:[#allocation2 + $0x40] sm:$0xff]
          %v583 = vld [vmem:[#allocation2 + $0x48] sm:$0xff]
          %v584 = vld [vmem:[#allocation2 + $0x50] sm:$0xff]
          %v585 = vld [vmem:[#allocation2 + $0x58] sm:$0xff]
          %v586 = vld [vmem:[#allocation2 + $0x60] sm:$0xff]
          %v587 = vld [vmem:[#allocation2 + $0x68] sm:$0xff]
          %v588 = vld [vmem:[#allocation2 + $0x70] sm:$0xff]
          %v589 = vld [vmem:[#allocation2 + $0x78] sm:$0xff]
          %v590 = vld [vmem:[%s258] sm:$0x1]
          %v592 = vlaneseq
          %v593 = vshrl.u32 %v592, 7
          %v594 = vsub.s32 0, %v593
          %v595 = vrot.slane %v590, %v594
          %v597 = vadd.f32 %v574, %v595
          %v598 = vadd.f32 %v575, %v595
          %v599 = vadd.f32 %v576, %v595
          %v600 = vadd.f32 %v577, %v595
          %v601 = vadd.f32 %v578, %v595
          %v602 = vadd.f32 %v579, %v595
          %v603 = vadd.f32 %v580, %v595
          %v604 = vadd.f32 %v581, %v595
          %v605 = vadd.f32 %v582, %v595
          %v606 = vadd.f32 %v583, %v595
          %v607 = vadd.f32 %v584, %v595
          %v608 = vadd.f32 %v585, %v595
          %v609 = vadd.f32 %v586, %v595
          %v610 = vadd.f32 %v587, %v595
          %v611 = vadd.f32 %v588, %v595
          %v612 = vadd.f32 %v589, %v595
          %613 = vst [vmem:[%s289] sm:$0xff] %v597
          %614 = vst [vmem:[%s289 + $0x8] sm:$0xff] %v598
          %615 = vst [vmem:[%s289 + $0x10] sm:$0xff] %v599
          %616 = vst [vmem:[%s289 + $0x18] sm:$0xff] %v600
          %617 = vst [vmem:[%s289 + $0x20] sm:$0xff] %v601
          %618 = vst [vmem:[%s289 + $0x28] sm:$0xff] %v602
          %619 = vst [vmem:[%s289 + $0x30] sm:$0xff] %v603
          %620 = vst [vmem:[%s289 + $0x38] sm:$0xff] %v604
          %621 = vst [vmem:[%s289 + $0x40] sm:$0xff] %v605
          %622 = vst [vmem:[%s289 + $0x48] sm:$0xff] %v606
          %623 = vst [vmem:[%s289 + $0x50] sm:$0xff] %v607
          %624 = vst [vmem:[%s289 + $0x58] sm:$0xff] %v608
          %625 = vst [vmem:[%s289 + $0x60] sm:$0xff] %v609
          %626 = vst [vmem:[%s289 + $0x68] sm:$0xff] %v610
          %627 = vst [vmem:[%s289 + $0x70] sm:$0xff] %v611
          %628 = vst [vmem:[%s289 + $0x78] sm:$0xff] %v612
        $region52: #{tpu_custom_call.1} parent=31 // pred_fallthru
          _
        %s629 = sand.u32 %s134, 1
        %s630 = scalar_lea.sflag [#allocation5], %s629
        %s631 = sand.u32 %s134, 1
        %s632 = smul.addr %s631, 128
        %s633 = scalar_lea.vmem [#allocation9], %s632
        // Predicated region
        $region53: #{tpu_custom_call.1} parent=31 // pred_check
          %p634 = pneg %p144
        $region54: #{tpu_custom_call.1} parent=31 // pred_check_branch
          %636 = sbr.rel (%p634) target = $region56
        $region55: #{tpu_custom_call.1} parent=31 // pred_region
          %s637 = smul.u32 16, %s28
          %s639 = ssub.s32 2048, 2048
          %640 = vsyncadd %s630, %s639
          %s641 = smul.addr %s637, 6
          %s642 = sadd.s32 %s29, %s641
          %s643 = smul.addr %s642, 128
          %s644 = scalar_lea.hbm %s3, %s643
          %s645 = sshll.u32 %s633, 4
          %s646 = int_to_ptr.vmem [resolvable:$true] %s645
          %651 = dma.vmem_to_hbm [thread:$0]  %s646, 2048, %s644, %s630, 128, 768, 8
        $region56: #{tpu_custom_call.1} parent=31 // pred_fallthru
          _
      $region32: #{tpu_custom_call.1} parent=5 // pred_fallthru
        _
      %p652 = scmp.le.s32.totalorder 2, %s18
      // Predicated region
      $region57: #{tpu_custom_call.1} parent=5 // pred_check
        %p653 = pneg %p652
      $region58: #{tpu_custom_call.1} parent=5 // pred_check_branch
        %655 = sbr.rel (%p653) target = $region60
      $region59: #{tpu_custom_call.1} parent=5 // pred_region
        %s656 = ssub.s32 %s18, 2
        // Predicated region
        $region61: #{tpu_custom_call.1} parent=59 // pred_check
          %p657 = pneg %p150
        $region62: #{tpu_custom_call.1} parent=59 // pred_check_branch
          %659 = sbr.rel (%p657) target = $region64
        $region63: #{tpu_custom_call.1} parent=59 // pred_region
          %s660 = sand.u32 %s135, 1
          %s661 = scalar_lea.sflag [#allocation5], %s660
          %s662 = sand.u32 %s135, 1
          %s663 = smul.addr %s662, 128
          %s664 = scalar_lea.vmem [#allocation9], %s663
          %665 = dma.done %s661, 2048
        $region64: #{tpu_custom_call.1} parent=59 // pred_fallthru
          _
      $region60: #{tpu_custom_call.1} parent=5 // pred_fallthru
        _
    $region6: #{tpu_custom_call.1} parent=1 // loop_footer
      %s22 = sadd.s32 1, %s18
    $region7: #{tpu_custom_call.1} parent=1 // loop_footer_branch
      %17 = sbr.rel target = $region3
    $region8: #{tpu_custom_call.1} parent=1 // loop_exit
      _
    %666 = vsyncpa [#allocation4], 1
    %s667 = scalar_lea.sflag [#allocation4], 1
    %668 = vsyncpa %s667, 1
    %669 = vsyncpa [#allocation7], 1
    %s670 = scalar_lea.sflag [#allocation7], 1
    %671 = vsyncpa %s670, 1
    %672 = vsyncpa [#allocation5], 1
    %s673 = scalar_lea.sflag [#allocation5], 1
    %674 = vsyncpa %s673, 1

</llo_original>
